<compile_context>
chip_gen: v7x
topology: tpu7x:2x2x1
jax: 0.10.0
libtpu: 0.0.40
codegen_flags: <defaults>
</compile_context>

<pallas_src>
import math

import jax
import jax.numpy as jnp
from jax import lax
from jax.experimental import pallas as pl
from jax.experimental.pallas import tpu as pltpu


def _cdiv(a, m):
    return -(-a // m)


def _round_up(a, m):
    return -(-a // m) * m


def _make_kernel(dim: int, fold: int):
    """Kernel over folded rows: out[row, j*dim + d] = emb(x[row, j], d)."""
    half = dim // 2
    width = fold * dim
    neg_scale = -math.log(10000.0) / (half - 1)
    half_pi = math.pi / 2.0

    def kernel(x_ref, out_ref):
        # x_ref:   (TR, fold)  float32  — `fold` consecutive timesteps per folded row
        # out_ref: (TR, width)           — lane L = j*dim + d  ->  (timestep j, feature d)
        tr = out_ref.shape[0]

        # ---- per-lane constant tables (one iota + a few selects + `width` exps per tile) ----
        lane = lax.broadcasted_iota(jnp.int32, (1, width), 1)
        d = lane                               # feature index within each dim-wide group
        for j in range(1, fold):
            d = jnp.where(lane >= j * dim, lane - j * dim, d)
        k = jnp.where(d >= half, d - half, d)  # frequency index
        freqs = jnp.exp(k.astype(jnp.float32) * neg_scale)                        # (1, width)
        phase = jnp.where(d >= half, half_pi, 0.0).astype(jnp.float32)            # cos = sin(.+pi/2)

        # ---- expand x across lane groups: x_full[row, j*dim + d] = x[row, j] ----------------
        xb = x_ref[...]                                                           # (TR, fold)
        x_full = jnp.broadcast_to(xb[:, fold - 1:fold], (tr, width))
        for j in range(fold - 2, -1, -1):
            x_full = jnp.where(lane < (j + 1) * dim, xb[:, j:j + 1], x_full)

        # ---- exactly one transcendental per output element, stored lane-dense ---------------
        out_ref[...] = jnp.sin(x_full * freqs + phase).astype(out_ref.dtype)

    return kernel


def sinusoidal_pos_emb(x, dim, *, out_dtype=jnp.float32):
    """Pallas equivalent of SinusoidalPosEmb(dim)(x).

    x: (B,) array of timesteps (any real/int dtype).
    returns: (B, dim) [sin(x*f) | cos(x*f)],  f_k = exp(-k*ln(1e4)/(dim/2 - 1)).
    """
    assert dim % 2 == 0, "dim must be even"
    assert dim >= 4, "dim must be >= 4 (dim == 2 divides by zero, as in the PyTorch module)"

    b = x.shape[0]
    xf = x.astype(jnp.float32)

    # Lane-densify small feature dims: fold `fold` consecutive timesteps into one
    # 128-lane output row (unmasked full-width stores). Wrapper reshapes are free
    # (contiguous).  For dims that don't divide 128 (or dim >= 128) no folding.
    if dim < 128 and 128 % dim == 0:
        fold = 128 // dim
    else:
        fold = 1
    width = fold * dim

    # ---- batch tiling: ~2 MiB output tiles, near-minimal padding, >=2 grid steps --------
    rows = _cdiv(b, fold)                                        # folded rows needed
    max_tr = max(8, ((2 << 20) // (width * 4)) // 8 * 8)         # ~2 MiB f32 out tile
    if rows >= 16:
        # Ensure at least 2 grid steps so v7x megacore shards tiles across both TCs.
        max_tr = min(max_tr, _round_up(_cdiv(rows, 2), 8))
    num_tiles = _cdiv(rows, max_tr)
    tr = _round_up(_cdiv(rows, num_tiles), 8)                    # rows per tile (mult of 8)
    rows_pad = num_tiles * tr
    b_pad = rows_pad * fold

    if b_pad != b:
        xf = jnp.pad(xf, (0, b_pad - b))
    x2 = xf.reshape(rows_pad, fold)

    out_itemsize = jnp.dtype(out_dtype).itemsize
    cost = pl.CostEstimate(
        flops=rows_pad * width * (2 + max(fold - 1, 0)),         # mul + add (+ expand selects)
        transcendentals=rows_pad * width,                        # exactly one sin per element
        bytes_accessed=rows_pad * (width * out_itemsize + fold * 4),
    )

    out = pl.pallas_call(
        _make_kernel(dim, fold),
        out_shape=jax.ShapeDtypeStruct((rows_pad, width), out_dtype),
        grid=(num_tiles,),
        in_specs=[pl.BlockSpec((tr, fold), lambda i: (i, 0))],
        out_specs=pl.BlockSpec((tr, width), lambda i: (i, 0)),
        compiler_params=pltpu.CompilerParams(
            dimension_semantics=("parallel",),                   # batch tiles are independent
        ),
        cost_estimate=cost,
    )(x2)

    out = out.reshape(rows_pad * fold, dim)                      # free contiguous reshape
    return out if b_pad == b else out[:b]


def _reference(x, dim):
    """Plain-JAX transcription of the PyTorch module (the spec)."""
    half = dim // 2
    scale = math.log(10000.0) / (half - 1)
    freqs = jnp.exp(jnp.arange(half, dtype=jnp.float32) * -scale)
    emb = x.astype(jnp.float32)[:, None] * freqs[None, :]
    return jnp.concatenate([jnp.sin(emb), jnp.cos(emb)], axis=-1)


def _max_abs_err(a, b):
    return float(jnp.max(jnp.abs(a - b)))


if __name__ == "__main__":
    key = jax.random.PRNGKey(0)
    k1, k2, k3, k4 = jax.random.split(key, 4)

    # f32 sin/cos at |arg| ~ 1e3 are conditioning-limited (~|arg|*eps plus small
    # implementation differences between the in-kernel and XLA lowerings), so large
    # timesteps use a conditioning-aware tolerance; small arguments use a strict one.
    TOL_LARGE = 5e-3
    TOL_SMALL = 1e-4

    # Primary small example: batch of 8 diffusion timesteps, dim=32 embedding.
    B, DIM = 8, 32
    x = jax.random.uniform(k1, (B,), dtype=jnp.float32, minval=0.0, maxval=1000.0)
    out = jax.block_until_ready(sinusoidal_pos_emb(x, DIM))
    assert out.shape == (B, DIM) and out.dtype == jnp.float32, (out.shape, out.dtype)
    assert _max_abs_err(out, _reference(x, DIM)) < TOL_LARGE, "mismatch (primary)"

    # Strict check on well-conditioned (small) arguments — validates formula/ordering/layout.
    xs = jax.random.uniform(k2, (64,), dtype=jnp.float32, minval=0.0, maxval=4.0)
    outs = jax.block_until_ready(sinusoidal_pos_emb(xs, DIM))
    assert _max_abs_err(outs, _reference(xs, DIM)) < TOL_SMALL, "mismatch (strict small-arg)"

    # Multi-tile + padding + lane-folding path (B=2050 -> 2 grid steps, minimal padding).
    x2 = jax.random.uniform(k3, (2050,), dtype=jnp.float32, minval=0.0, maxval=1000.0)
    out2 = jax.block_until_ready(sinusoidal_pos_emb(x2, DIM))
    assert out2.shape == (2050, DIM)
    assert _max_abs_err(out2, _reference(x2, DIM)) < TOL_LARGE, "mismatch (tiled path)"

    # No-fold path (dim >= 128), two grid steps, no padding.
    x3 = jax.random.uniform(k4, (16,), dtype=jnp.float32, minval=0.0, maxval=1000.0)
    out3 = jax.block_until_ready(sinusoidal_pos_emb(x3, 128))
    assert out3.shape == (16, 128)
    assert _max_abs_err(out3, _reference(x3, 128)) < TOL_LARGE, "mismatch (dim=128 path)"

    print("KERNEL_OK")
</pallas_src>

<mosaic_0001>
module attributes {stable_mosaic.version = 11 : i64} {
  func.func @kernel(%arg0: i32, %arg1: memref<8x4xf32, #tpu.memory_space<vmem>>, %arg2: memref<8x128xf32, #tpu.memory_space<vmem>>) attributes {dimension_semantics = [#tpu.dimension_semantics<parallel>], iteration_bounds = array<i64: 1>, scalar_prefetch = 0 : i64, scratch_operands = 0 : i64, tpu.core_type = #tpu.core_type<tc>, window_params = [{transform_indices = @transform_0, window_bounds = array<i64: 8, 4>}, {transform_indices = @transform_1, window_bounds = array<i64: 8, 128>}]} {
    %0 = tpu.iota {dimensions = array<i32: 1>} : vector<1x128xi32>
    %c32_i32 = arith.constant 32 : i32
    %1 = vector.broadcast %c32_i32 : i32 to vector<1x128xi32>
    %2 = arith.cmpi sge, %0, %1 : vector<1x128xi32>
    %c32_i32_0 = arith.constant 32 : i32
    %3 = vector.broadcast %c32_i32_0 : i32 to vector<1x128xi32>
    %4 = arith.subi %0, %3 : vector<1x128xi32>
    %5 = arith.select %2, %4, %0 : vector<1x128xi1>, vector<1x128xi32>
    %c64_i32 = arith.constant 64 : i32
    %6 = vector.broadcast %c64_i32 : i32 to vector<1x128xi32>
    %7 = arith.cmpi sge, %0, %6 : vector<1x128xi32>
    %c64_i32_1 = arith.constant 64 : i32
    %8 = vector.broadcast %c64_i32_1 : i32 to vector<1x128xi32>
    %9 = arith.subi %0, %8 : vector<1x128xi32>
    %10 = arith.select %7, %9, %5 : vector<1x128xi1>, vector<1x128xi32>
    %c96_i32 = arith.constant 96 : i32
    %11 = vector.broadcast %c96_i32 : i32 to vector<1x128xi32>
    %12 = arith.cmpi sge, %0, %11 : vector<1x128xi32>
    %c96_i32_2 = arith.constant 96 : i32
    %13 = vector.broadcast %c96_i32_2 : i32 to vector<1x128xi32>
    %14 = arith.subi %0, %13 : vector<1x128xi32>
    %15 = arith.select %12, %14, %10 : vector<1x128xi1>, vector<1x128xi32>
    %c16_i32 = arith.constant 16 : i32
    %16 = vector.broadcast %c16_i32 : i32 to vector<1x128xi32>
    %17 = arith.cmpi sge, %15, %16 : vector<1x128xi32>
    %c16_i32_3 = arith.constant 16 : i32
    %18 = vector.broadcast %c16_i32_3 : i32 to vector<1x128xi32>
    %19 = arith.subi %15, %18 : vector<1x128xi32>
    %20 = arith.select %17, %19, %15 : vector<1x128xi1>, vector<1x128xi32>
    %21 = arith.sitofp %20 : vector<1x128xi32> to vector<1x128xf32>
    %cst = arith.constant -0.614022672 : f32
    %22 = vector.broadcast %cst : f32 to vector<1x128xf32>
    %23 = arith.mulf %21, %22 : vector<1x128xf32>
    %24 = math.exp %23 : vector<1x128xf32>
    %c16_i32_4 = arith.constant 16 : i32
    %25 = vector.broadcast %c16_i32_4 : i32 to vector<1x128xi32>
    %26 = arith.cmpi sge, %15, %25 : vector<1x128xi32>
    %cst_5 = arith.constant 1.57079637 : f32
    %cst_6 = arith.constant 0.000000e+00 : f32
    %27 = vector.broadcast %cst_5 : f32 to vector<1x128xf32>
    %28 = vector.broadcast %cst_6 : f32 to vector<1x128xf32>
    %29 = arith.select %26, %27, %28 : vector<1x128xi1>, vector<1x128xf32>
    %c0 = arith.constant 0 : index
    %c0_7 = arith.constant 0 : index
    %30 = vector.load %arg1[%c0, %c0_7] : memref<8x4xf32, #tpu.memory_space<vmem>>, vector<8x4xf32>
    %31 = vector.extract_strided_slice %30 {offsets = [0, 3], sizes = [8, 1], strides = [1, 1]} : vector<8x4xf32> to vector<8x1xf32>
    %32 = vector.shape_cast %31 : vector<8x1xf32> to vector<8x1xf32>
    %33 = vector.broadcast %32 : vector<8x1xf32> to vector<8x128xf32>
    %c96_i32_8 = arith.constant 96 : i32
    %34 = vector.broadcast %c96_i32_8 : i32 to vector<1x128xi32>
    %35 = arith.cmpi slt, %0, %34 : vector<1x128xi32>
    %36 = vector.extract_strided_slice %30 {offsets = [0, 2], sizes = [8, 1], strides = [1, 1]} : vector<8x4xf32> to vector<8x1xf32>
    %37 = vector.shape_cast %35 : vector<1x128xi1> to vector<1x128xi1>
    %38 = vector.broadcast %37 : vector<1x128xi1> to vector<8x128xi1>
    %39 = vector.shape_cast %36 : vector<8x1xf32> to vector<8x1xf32>
    %40 = vector.broadcast %39 : vector<8x1xf32> to vector<8x128xf32>
    %41 = arith.select %38, %40, %33 : vector<8x128xi1>, vector<8x128xf32>
    %c64_i32_9 = arith.constant 64 : i32
    %42 = vector.broadcast %c64_i32_9 : i32 to vector<1x128xi32>
    %43 = arith.cmpi slt, %0, %42 : vector<1x128xi32>
    %44 = vector.extract_strided_slice %30 {offsets = [0, 1], sizes = [8, 1], strides = [1, 1]} : vector<8x4xf32> to vector<8x1xf32>
    %45 = vector.shape_cast %43 : vector<1x128xi1> to vector<1x128xi1>
    %46 = vector.broadcast %45 : vector<1x128xi1> to vector<8x128xi1>
    %47 = vector.shape_cast %44 : vector<8x1xf32> to vector<8x1xf32>
    %48 = vector.broadcast %47 : vector<8x1xf32> to vector<8x128xf32>
    %49 = arith.select %46, %48, %41 : vector<8x128xi1>, vector<8x128xf32>
    %c32_i32_10 = arith.constant 32 : i32
    %50 = vector.broadcast %c32_i32_10 : i32 to vector<1x128xi32>
    %51 = arith.cmpi slt, %0, %50 : vector<1x128xi32>
    %52 = vector.extract_strided_slice %30 {offsets = [0, 0], sizes = [8, 1], strides = [1, 1]} : vector<8x4xf32> to vector<8x1xf32>
    %53 = vector.shape_cast %51 : vector<1x128xi1> to vector<1x128xi1>
    %54 = vector.broadcast %53 : vector<1x128xi1> to vector<8x128xi1>
    %55 = vector.shape_cast %52 : vector<8x1xf32> to vector<8x1xf32>
    %56 = vector.broadcast %55 : vector<8x1xf32> to vector<8x128xf32>
    %57 = arith.select %54, %56, %49 : vector<8x128xi1>, vector<8x128xf32>
    %58 = vector.broadcast %24 : vector<1x128xf32> to vector<8x128xf32>
    %59 = arith.mulf %57, %58 : vector<8x128xf32>
    %60 = vector.broadcast %29 : vector<1x128xf32> to vector<8x128xf32>
    %61 = arith.addf %59, %60 : vector<8x128xf32>
    %62 = math.sin %61 : vector<8x128xf32>
    %c0_11 = arith.constant 0 : index
    %c0_12 = arith.constant 0 : index
    %63 = vector.load %arg2[%c0_11, %c0_12] : memref<8x128xf32, #tpu.memory_space<vmem>>, vector<8x128xf32>
    tpu.vector_store %arg2[%c0_11, %c0_12], %62 {strides = array<i32>} : memref<8x128xf32, #tpu.memory_space<vmem>>, vector<8x128xf32>,
    return
  }
  func.func @transform_0(%arg0: i32) -> (i32, i32) {
    %c0_i32 = arith.constant 0 : i32
    %c0_i32_0 = arith.constant 0 : i32
    return %arg0, %c0_i32 : i32, i32
  }
  func.func @transform_1(%arg0: i32) -> (i32, i32) {
    %c0_i32 = arith.constant 0 : i32
    %c0_i32_0 = arith.constant 0 : i32
    return %arg0, %c0_i32 : i32, i32
  }
}

</mosaic_0001>

<llo_original>
// kernel: tpu_custom_call.1
$region0: #{tpu_custom_call.1}
  #allocation0 [shape = 'u32[]', space=smem, size = 0x4, offset = 0x4, fixed_abs, tag = 'smem constant byte address 0x4 - core index']
  #allocation1 [shape = 'u32[144,128]{1,0:T(1,128)}', space=vmem, size = 0x12000, scoped, tag = 'internal scratch']
  %s0 = inlined_call_operand.vmem [shape: f32[8,4], index: 0, kind: input, shape index: {}]
  %s1 = inlined_call_operand.hbm [shape: f32[8,128], index: 1, kind: output, shape index: {}]
  %s2 = sld [smem:[#allocation0]]
  $region14: #{tpu_custom_call.1} parent=0
    _
  %s4 = ssub.s32 1, %s2
  %s5 = scalar_select 0, %s4, %s2
  $region1: #{tpu_custom_call.1} parent=0
    #allocation2 [shape = 'u8[4096]{0}', space=vmem, size = 0x1000, scoped, tag = 'output window, operand 0, single buffered']
    #allocation3 [shape = 's32[1]{0}', space=sflag, size = 0x4, scoped, tag = 'scoped memory for tpu_custom_call.1']
    %6 = vsyncpa [#allocation3], 0
    // Predicated region
    $region2: #{tpu_custom_call.1} parent=1 // pred_check
      _
    $region3: #{tpu_custom_call.1} parent=1 // pred_check_branch
      %8 = sbr.rel (0) target = $region5
    $region4: #{tpu_custom_call.1} parent=1 // pred_region
      _
    $region5: #{tpu_custom_call.1} parent=1 // pred_fallthru
      _
    %v9 = vlaneseq
    %v10 = vand.u32 %v9, 127
    %vm11 = vcmp.ge.s32.totalorder %v10, 32
    %v12 = vsub.s32 %v10, 32
    %v13 = vsel %vm11, %v12, %v10
    %vm14 = vcmp.ge.s32.totalorder %v10, 64
    %v15 = vsub.s32 %v10, 64
    %v16 = vsel %vm14, %v15, %v13
    %vm17 = vcmp.ge.s32.totalorder %v10, 96
    %v18 = vsub.s32 %v10, 96
    %v19 = vsel %vm17, %v18, %v16
    %vm20 = vcmp.ge.s32.totalorder %v19, 16
    %v21 = vsub.s32 %v19, 16
    %v22 = vsel %vm20, %v21, %v19
    %v23 = vcvt.s32.f32 %v22
    %v24 = vmul.f32 %v23, -0.6140227
    %v25 = vmul.f32 %v24, 1.442695
    %v26 = vpow.pop %v25
    %v27 = vsel %vm20, 1.5707964, 0.0
    %v28 = vld [vmem:[%s0] sm:$0xff]
    %30 = vset.pattern.permute.xlu0 3
    %31 = vperm.xlu0 %30, %v28
    %v32 = vpop.permute.xlu0 %31
    %vm34 = vcmp.lt.s32.totalorder %v10, 96
    %v35 = vsel %vm34, 1, 0
    %vm36 = vcmp.eq.s32.totalorder %v35, 1
    %37 = vset.pattern.permute.xlu0 2
    %38 = vperm.xlu0 %37, %v28
    %v39 = vpop.permute.xlu0 %38
    %v41 = vsel %vm36, %v39, %v32
    %vm42 = vcmp.lt.s32.totalorder %v10, 64
    %v43 = vsel %vm42, 1, 0
    %vm44 = vcmp.eq.s32.totalorder %v43, 1
    %45 = vset.pattern.permute.xlu0 1
    %46 = vperm.xlu0 %45, %v28
    %v47 = vpop.permute.xlu0 %46
    %v49 = vsel %vm44, %v47, %v41
    %vm50 = vcmp.lt.s32.totalorder %v10, 32
    %v51 = vsel %vm50, 1, 0
    %vm52 = vcmp.eq.s32.totalorder %v51, 1
    %53 = vset.pattern.permute.xlu0 0
    %54 = vperm.xlu0 %53, %v28
    %v55 = vpop.permute.xlu0 %54
    %v57 = vsel %vm52, %v55, %v49
    %v58 = vmul.f32 %v57, %v26
    %v59 = vadd.f32 %v58, %v27
    %v60 = vand.u32 2147483647, %v59
    %vm61 = vcmp.le.f32.partialorder %v60, 0.7853982
    %vm62 = vcmp.lt.s32.totalorder %v59, 0
    %v63 = vand.u32 %v59, 2139095040
    %v64 = vshrl.u32 %v63, 23
    %v65 = vsub.s32 %v64, 127
    %v66 = vand.u32 2147483647, %v59
    %v67 = vand.u32 %v66, 8388607
    %v68 = vor.u32 %v67, 8388608
    %v69 = vsub.s32 0, %v68
    %v70 = vadd.s32 %v65, 1
    %vm71 = vcmp.gt.s32.totalorder %v70, 0
    %v72 = vsel %vm71, %v70, 0
    %v73 = vshrl.u32 %v72, 5
    %v74 = vand.u32 %v72, 31
    %v75 = vsub.s32 32, %v74
    %v76 = vshrl.u32 683565275, %v75
    %v77 = vshll.u32 683565275, %v74
    %v78 = vshrl.u32 2475754826, %v75
    %v79 = vor.u32 %v77, %v78
    %v80 = vshll.u32 2475754826, %v74
    %v81 = vshrl.u32 2131351028, %v75
    %v82 = vor.u32 %v80, %v81
    %v83 = vshll.u32 2131351028, %v74
    %v84 = vshrl.u32 2102212464, %v75
    %v85 = vor.u32 %v83, %v84
    %v86 = vshll.u32 2102212464, %v74
    %v87 = vshrl.u32 920167782, %v75
    %v88 = vor.u32 %v86, %v87
    %v89 = vshll.u32 920167782, %v74
    %v90 = vshrl.u32 1326507024, %v75
    %v91 = vor.u32 %v89, %v90
    %vm92 = vcmp.lt.s32.totalorder %v73, 1
    %vm93 = vcmp.lt.s32.totalorder %v73, 2
    %vm94 = vcmp.lt.s32.totalorder %v73, 3
    %vm95 = vcmp.lt.s32.totalorder %v73, 4
    %v96 = vsel %vm92, %v76, %v79
    %v97 = vsel %vm95, %v85, 2102212464
    %v98 = vsel %vm94, %v82, %v97
    %v99 = vsel %vm93, %v96, %v98
    %v100 = vsel %vm92, %v79, %v82
    %v101 = vsel %vm95, %v88, 920167782
    %v102 = vsel %vm94, %v85, %v101
    %v103 = vsel %vm93, %v100, %v102
    %v104 = vsel %vm92, %v82, %v85
    %v105 = vsel %vm95, %v91, 1326507024
    %v106 = vsel %vm94, %v88, %v105
    %v107 = vsel %vm93, %v104, %v106
    %v108 = vshll.u32 %v68, 8
    %v109 = vmul.u32.u64.compose %v108, %v107
    %v110 = vextract.low.u32 %v109
    %v111 = vextract.high.u32 %v109
    %v112 = vmul.u32.u64.compose %v108, %v103
    %v113 = vextract.low.u32 %v112
    %v114 = vextract.high.u32 %v112
    %v115 = vmul.u32 %v108, %v99
    %v116 = vadd.s32 %v111, %v113
    %vm117 = vc.u32 %v111, %v113
    %v118 = vadd.s32 %v114, 1
    %v119 = vsel %vm117, %v118, %v114
    %v120 = vadd.s32 %v115, %v119
    %v121 = vadd.s32 %v120, 536870912
    %v122 = vshrl.u32 %v121, 30
    %v123 = vshll.u32 %v122, 30
    %v124 = vsub.s32 %v120, %v123
    %vm125 = vcmp.lt.s32.totalorder %v124, 0
    %v126 = vsub.s32 0, %v124
    %v127 = vsel %vm125, %v126, %v124
    %v128 = vclz %v127
    %v129 = vsub.s32 %v128, 2
    %vm130 = vcmp.gt.s32.totalorder 0, %v129
    %v131 = vsel %vm130, 0, %v129
    %v132 = vsub.s32 32, %v131
    %v133 = vshll.u32 %v124, %v131
    %v134 = vshrl.u32 %v116, %v132
    %v135 = vor.u32 %v133, %v134
    %v136 = vsub.s32 4294967266, %v131
    %v137 = vadd.s32 %v136, 127
    %v138 = vshll.u32 %v137, 23
    %v139 = vor.u32 4788187, %v138
    %v140 = vand.u32 2147483647, %v139
    %v142 = vcvt.s32.f32 %v135
    %v143 = vmul.f32 %v142, %v140
    %v144 = vxor.u32 %v143, 2147483648
    %v145 = vsel %vm62, %v144, %v143
    %v146 = vsub.s32 4, %v122
    %v147 = vsel %vm62, %v146, %v122
    %v148 = vsel %vm61, %v59, %v145
    %v149 = vsel %vm61, 0, %v147
    %v150 = vcosq.f32.pop %v148
    %v151 = vsinq.f32.pop %v148
    %vm152 = vweird.f32 %v59
    %v153 = vadd.s32 %v149, 3
    %v154 = vand.u32 %v153, 3
    %vm155 = vcmp.lt.s32.totalorder %v154, 2
    %vm156 = vcmp.eq.s32.totalorder %v154, 0
    %v157 = vxor.u32 %v151, 2147483648
    %v158 = vsel %vm156, %v150, %v157
    %vm159 = vcmp.eq.s32.totalorder %v154, 2
    %v160 = vxor.u32 %v150, 2147483648
    %v161 = vsel %vm159, %v160, %v151
    %v162 = vsel %vm155, %v158, %v161
    %v163 = vsel %vm152, nan, %v162
    %164 = vst [vmem:[#allocation2] sm:$0xff] %v163
    // Predicated region
    $region6: #{tpu_custom_call.1} parent=1 // pred_check
      _
    $region7: #{tpu_custom_call.1} parent=1 // pred_check_branch
      %166 = sbr.rel (0) target = $region9
    $region8: #{tpu_custom_call.1} parent=1 // pred_region
      %s168 = ssub.s32 128, 128
      %169 = vsyncadd [#allocation3], %s168
      %s171 = sshll.u32 [#allocation2], 4
      %s172 = int_to_ptr.vmem [resolvable:$true] %s171
      %174 = dma.vmem_to_hbm [thread:$0]  %s172, 128, %s1, [#allocation3]
    $region9: #{tpu_custom_call.1} parent=1 // pred_fallthru
      _
    // Predicated region
    $region10: #{tpu_custom_call.1} parent=1 // pred_check
      _
    $region11: #{tpu_custom_call.1} parent=1 // pred_check_branch
      %176 = sbr.rel (0) target = $region13
    $region12: #{tpu_custom_call.1} parent=1 // pred_region
      %177 = dma.done [#allocation3], 128
    $region13: #{tpu_custom_call.1} parent=1 // pred_fallthru
      _
    %178 = vsyncpa [#allocation3], 1

</llo_original>
